<compile_context>
chip_gen: v5e
topology: v5e:2x2
jax: 0.10.0
libtpu: 0.0.40
codegen_flags: <defaults>
</compile_context>

<pallas_src>
import jax
import jax.numpy as jnp
from jax.experimental import pallas as pl
from jax.experimental.pallas import tpu as pltpu

EPS = 1e-5  # PyTorch BatchNorm2d default


def basic_block_kernel(x_ref, w1_ref, s1_ref, b1_ref, w2_ref, s2_ref, b2_ref,
                       o_ref, mid_ref):
    # x_ref:   (1, H+2, W*C) f32   NHWC rows flattened to W*C lanes, zero row above/below
    # w*_ref:  (3, W*C, W*C) bf16  banded conv-as-matmul weights, one slab per kernel row
    # s*,b*:   (1, W*C)      f32   folded BN scale/bias, tiled along W
    # o_ref:   (1, H, W*C)   f32
    # mid_ref: (H+2, W*C)    f32   scratch: H-padded conv1 activation
    _, H, WC = o_ref.shape

    # ---- conv1: one K=N=W*C banded matmul per kernel row (bf16 MXU, f32 accumulate) ----
    acc = jnp.dot(x_ref[0, 0:H, :].astype(jnp.bfloat16), w1_ref[0],
                  preferred_element_type=jnp.float32)
    for kh in (1, 2):
        acc = acc + jnp.dot(x_ref[0, kh:kh + H, :].astype(jnp.bfloat16), w1_ref[kh],
                            preferred_element_type=jnp.float32)

    # ---- bn1 (folded) + relu, full 128-lane VPU ----
    out1 = jnp.maximum(acc * s1_ref[...] + b1_ref[...], 0.0)

    # ---- stage conv1 activation with one zero halo row above/below.  The halo rows are
    #      rewritten every step (cheap) so there is no cross-iteration scratch state and
    #      the "parallel" batch axis stays correct under core sharding. ----
    mid_ref[0:1, :] = jnp.zeros((1, WC), jnp.float32)
    mid_ref[H + 1:H + 2, :] = jnp.zeros((1, WC), jnp.float32)
    mid_ref[1:H + 1, :] = out1

    # ---- conv2 ----
    acc2 = jnp.dot(mid_ref[0:H, :].astype(jnp.bfloat16), w2_ref[0],
                   preferred_element_type=jnp.float32)
    for kh in (1, 2):
        acc2 = acc2 + jnp.dot(mid_ref[kh:kh + H, :].astype(jnp.bfloat16), w2_ref[kh],
                              preferred_element_type=jnp.float32)

    # ---- bn2 (folded) + residual + relu; identity = interior rows of the padded input ----
    identity = x_ref[0, 1:H + 1, :]
    o_ref[0] = jnp.maximum(acc2 * s2_ref[...] + b2_ref[...] + identity, 0.0)


def basic_block_pallas(x_nchw, w1_oihw, bn1, w2_oihw, bn2):
    """x_nchw: (B, C, H, W) f32; w*_oihw: (C, C, 3, 3); bn*: (gamma, beta, mean, var)."""
    B, C, H, W = x_nchw.shape
    Cout = w1_oihw.shape[0]
    assert Cout == C and w2_oihw.shape == (C, C, 3, 3), \
        "downsample=None / stride=1 requires inplanes == planes"
    WC = W * C

    # NCHW -> (B, H, W*C) rows + one zero row above/below (transpose/reshape/pad fuse into
    # a single XLA copy; the W*C flattening itself is free).
    x_rows = jnp.transpose(x_nchw, (0, 2, 3, 1)).reshape(B, H, WC)
    x_rows = jnp.pad(x_rows, ((0, 0), (1, 1), (0, 0)))

    def fold_bn(bn):
        gamma, beta, mean, var = bn
        s = gamma / jnp.sqrt(var + EPS)
        b = beta - mean * s
        # tile per-channel params across W so they line up with the (W*C) lane layout
        return (jnp.tile(s, W).reshape(1, WC).astype(jnp.float32),
                jnp.tile(b, W).reshape(1, WC).astype(jnp.float32))

    def banded(w_oihw):
        # (Cout, Cin, 3, 3) -> 3 slabs of shape (W*Cin, W*Cout).  Slab kh implements the
        # width direction of the conv (including zero padding at the edges) as one banded
        # matmul: block (wp, w) of slab kh equals w[:, :, kh, kw].T when wp == w + kw - 1.
        wt = jnp.transpose(w_oihw, (2, 3, 1, 0)).astype(jnp.float32)  # (kh, kw, Cin, Cout)
        slabs = []
        for kh in range(3):
            m = jnp.zeros((WC, WC), jnp.float32)
            for kw in range(3):
                band = jnp.eye(W, W, k=1 - kw, dtype=jnp.float32)
                m = m + jnp.kron(band, wt[kh, kw])
            slabs.append(m)
        return jnp.stack(slabs).astype(jnp.bfloat16)  # (3, W*C, W*C)

    s1, b1 = fold_bn(bn1)
    s2, b2 = fold_bn(bn2)
    w1b, w2b = banded(w1_oihw), banded(w2_oihw)

    out = pl.pallas_call(
        basic_block_kernel,
        out_shape=jax.ShapeDtypeStruct((B, H, WC), jnp.float32),
        grid_spec=pltpu.PrefetchScalarGridSpec(
            num_scalar_prefetch=0,
            grid=(B,),
            in_specs=[
                pl.BlockSpec((1, H + 2, WC), lambda b: (b, 0, 0)),
                pl.BlockSpec((3, WC, WC), lambda b: (0, 0, 0)),
                pl.BlockSpec((1, WC), lambda b: (0, 0)),
                pl.BlockSpec((1, WC), lambda b: (0, 0)),
                pl.BlockSpec((3, WC, WC), lambda b: (0, 0, 0)),
                pl.BlockSpec((1, WC), lambda b: (0, 0)),
                pl.BlockSpec((1, WC), lambda b: (0, 0)),
            ],
            out_specs=pl.BlockSpec((1, H, WC), lambda b: (b, 0, 0)),
            scratch_shapes=[pltpu.VMEM((H + 2, WC), jnp.float32)],
        ),
        compiler_params=pltpu.CompilerParams(dimension_semantics=("parallel",)),
    )(x_rows, w1b, s1, b1, w2b, s2, b2)

    # (B, H, W*C) -> NCHW.  The reshape is layout-free; only the transpose copies.
    return jnp.transpose(out.reshape(B, H, W, C), (0, 3, 1, 2))


def basic_block_reference(x_nchw, w1, bn1, w2, bn2):
    """Plain-JAX f32 reference (NCHW, like PyTorch) for correctness checking."""
    def conv3x3(x, w):
        return jax.lax.conv_general_dilated(
            x, w, window_strides=(1, 1), padding=((1, 1), (1, 1)),
            dimension_numbers=("NCHW", "OIHW", "NCHW"))

    def bn(x, p):
        gamma, beta, mean, var = p
        s = gamma / jnp.sqrt(var + EPS)
        return x * s[None, :, None, None] + (beta - mean * s)[None, :, None, None]

    out = jax.nn.relu(bn(conv3x3(x_nchw, w1), bn1))
    out = bn(conv3x3(out, w2), bn2)
    return jax.nn.relu(out + x_nchw)


if __name__ == "__main__":
    B, C, H, W = 2, 8, 16, 16  # inplanes == planes == 8, stride=1, downsample=None
    key = jax.random.PRNGKey(0)
    (k_x, k_w1, k_w2, k_g1, k_b1, k_m1, k_v1,
     k_g2, k_b2, k_m2, k_v2) = jax.random.split(key, 11)

    x = jax.random.normal(k_x, (B, C, H, W), jnp.float32)

    w1 = jax.random.normal(k_w1, (C, C, 3, 3), jnp.float32) * 0.1
    w2 = jax.random.normal(k_w2, (C, C, 3, 3), jnp.float32) * 0.1

    bn1 = (jax.random.uniform(k_g1, (C,), jnp.float32, 0.5, 1.5),   # gamma
           jax.random.normal(k_b1, (C,), jnp.float32) * 0.1,        # beta
           jax.random.normal(k_m1, (C,), jnp.float32) * 0.1,        # running_mean
           jax.random.uniform(k_v1, (C,), jnp.float32, 0.5, 1.5))   # running_var
    bn2 = (jax.random.uniform(k_g2, (C,), jnp.float32, 0.5, 1.5),
           jax.random.normal(k_b2, (C,), jnp.float32) * 0.1,
           jax.random.normal(k_m2, (C,), jnp.float32) * 0.1,
           jax.random.uniform(k_v2, (C,), jnp.float32, 0.5, 1.5))

    out = basic_block_pallas(x, w1, bn1, w2, bn2)
    out = jax.block_until_ready(out)

    ref = basic_block_reference(x, w1, bn1, w2, bn2)
    assert out.shape == (B, C, H, W)
    # bf16 MXU inputs with f32 accumulation -> loosened tolerance vs the f32 reference.
    err = jnp.max(jnp.abs(out - ref))
    assert jnp.allclose(out, ref, atol=5e-2, rtol=5e-2), f"max abs err {err}"

    print("KERNEL_OK")
</pallas_src>

<mosaic_0001>
module attributes {stable_mosaic.version = 11 : i64} {
  func.func @basic_block_kernel(%arg0: i32, %arg1: memref<1x18x128xf32, #tpu.memory_space<vmem>>, %arg2: memref<3x128x128xbf16, #tpu.memory_space<vmem>>, %arg3: memref<1x128xf32, #tpu.memory_space<vmem>>, %arg4: memref<1x128xf32, #tpu.memory_space<vmem>>, %arg5: memref<3x128x128xbf16, #tpu.memory_space<vmem>>, %arg6: memref<1x128xf32, #tpu.memory_space<vmem>>, %arg7: memref<1x128xf32, #tpu.memory_space<vmem>>, %arg8: memref<1x16x128xf32, #tpu.memory_space<vmem>>, %arg9: memref<18x128xf32, #tpu.memory_space<vmem>>) attributes {dimension_semantics = [#tpu.dimension_semantics<parallel>], iteration_bounds = array<i64: 2>, scalar_prefetch = 0 : i64, scratch_operands = 1 : i64, tpu.core_type = #tpu.core_type<tc>, window_params = [{transform_indices = @transform_0, window_bounds = array<i64: 1, 18, 128>}, {pipeline_mode = #tpu.pipeline_mode<synchronous>, transform_indices = @transform_1, window_bounds = array<i64: 3, 128, 128>}, {pipeline_mode = #tpu.pipeline_mode<synchronous>, transform_indices = @transform_2, window_bounds = array<i64: 1, 128>}, {pipeline_mode = #tpu.pipeline_mode<synchronous>, transform_indices = @transform_3, window_bounds = array<i64: 1, 128>}, {pipeline_mode = #tpu.pipeline_mode<synchronous>, transform_indices = @transform_4, window_bounds = array<i64: 3, 128, 128>}, {pipeline_mode = #tpu.pipeline_mode<synchronous>, transform_indices = @transform_5, window_bounds = array<i64: 1, 128>}, {pipeline_mode = #tpu.pipeline_mode<synchronous>, transform_indices = @transform_6, window_bounds = array<i64: 1, 128>}, {transform_indices = @transform_7, window_bounds = array<i64: 1, 16, 128>}]} {
    %c0 = arith.constant 0 : index
    %c0_0 = arith.constant 0 : index
    %c0_1 = arith.constant 0 : index
    %0 = vector.load %arg1[%c0, %c0_0, %c0_1] : memref<1x18x128xf32, #tpu.memory_space<vmem>>, vector<1x16x128xf32>
    %1 = vector.shape_cast %0 : vector<1x16x128xf32> to vector<16x128xf32>
    %2 = arith.truncf %1 : vector<16x128xf32> to vector<16x128xbf16>
    %c0_2 = arith.constant 0 : index
    %c0_3 = arith.constant 0 : index
    %c0_4 = arith.constant 0 : index
    %3 = vector.load %arg2[%c0_2, %c0_3, %c0_4] : memref<3x128x128xbf16, #tpu.memory_space<vmem>>, vector<1x128x128xbf16>
    %4 = vector.shape_cast %3 : vector<1x128x128xbf16> to vector<128x128xbf16>
    %cst = arith.constant dense<0.000000e+00> : vector<16x128xf32>
    %5 = tpu.matmul %2, %4, %cst {dimension_numbers = #tpu.dot_dimension_numbers<[1], [0], [0], [1], [0, 0, 1, 1], [], []>} : vector<16x128xbf16>, vector<128x128xbf16>, vector<16x128xf32> -> vector<16x128xf32>
    %c0_5 = arith.constant 0 : index
    %c1 = arith.constant 1 : index
    %c0_6 = arith.constant 0 : index
    %6 = vector.load %arg1[%c0_5, %c1, %c0_6] : memref<1x18x128xf32, #tpu.memory_space<vmem>>, vector<1x16x128xf32>
    %7 = vector.shape_cast %6 : vector<1x16x128xf32> to vector<16x128xf32>
    %8 = arith.truncf %7 : vector<16x128xf32> to vector<16x128xbf16>
    %c1_7 = arith.constant 1 : index
    %c0_8 = arith.constant 0 : index
    %c0_9 = arith.constant 0 : index
    %9 = vector.load %arg2[%c1_7, %c0_8, %c0_9] : memref<3x128x128xbf16, #tpu.memory_space<vmem>>, vector<1x128x128xbf16>
    %10 = vector.shape_cast %9 : vector<1x128x128xbf16> to vector<128x128xbf16>
    %cst_10 = arith.constant dense<0.000000e+00> : vector<16x128xf32>
    %11 = tpu.matmul %8, %10, %cst_10 {dimension_numbers = #tpu.dot_dimension_numbers<[1], [0], [0], [1], [0, 0, 1, 1], [], []>} : vector<16x128xbf16>, vector<128x128xbf16>, vector<16x128xf32> -> vector<16x128xf32>
    %12 = arith.addf %5, %11 : vector<16x128xf32>
    %c0_11 = arith.constant 0 : index
    %c2 = arith.constant 2 : index
    %c0_12 = arith.constant 0 : index
    %13 = vector.load %arg1[%c0_11, %c2, %c0_12] : memref<1x18x128xf32, #tpu.memory_space<vmem>>, vector<1x16x128xf32>
    %14 = vector.shape_cast %13 : vector<1x16x128xf32> to vector<16x128xf32>
    %15 = arith.truncf %14 : vector<16x128xf32> to vector<16x128xbf16>
    %c2_13 = arith.constant 2 : index
    %c0_14 = arith.constant 0 : index
    %c0_15 = arith.constant 0 : index
    %16 = vector.load %arg2[%c2_13, %c0_14, %c0_15] : memref<3x128x128xbf16, #tpu.memory_space<vmem>>, vector<1x128x128xbf16>
    %17 = vector.shape_cast %16 : vector<1x128x128xbf16> to vector<128x128xbf16>
    %cst_16 = arith.constant dense<0.000000e+00> : vector<16x128xf32>
    %18 = tpu.matmul %15, %17, %cst_16 {dimension_numbers = #tpu.dot_dimension_numbers<[1], [0], [0], [1], [0, 0, 1, 1], [], []>} : vector<16x128xbf16>, vector<128x128xbf16>, vector<16x128xf32> -> vector<16x128xf32>
    %19 = arith.addf %12, %18 : vector<16x128xf32>
    %c0_17 = arith.constant 0 : index
    %c0_18 = arith.constant 0 : index
    %20 = vector.load %arg3[%c0_17, %c0_18] : memref<1x128xf32, #tpu.memory_space<vmem>>, vector<1x128xf32>
    %21 = vector.broadcast %20 : vector<1x128xf32> to vector<16x128xf32>
    %22 = arith.mulf %19, %21 : vector<16x128xf32>
    %c0_19 = arith.constant 0 : index
    %c0_20 = arith.constant 0 : index
    %23 = vector.load %arg4[%c0_19, %c0_20] : memref<1x128xf32, #tpu.memory_space<vmem>>, vector<1x128xf32>
    %24 = vector.broadcast %23 : vector<1x128xf32> to vector<16x128xf32>
    %25 = arith.addf %22, %24 : vector<16x128xf32>
    %cst_21 = arith.constant 0.000000e+00 : f32
    %26 = vector.broadcast %cst_21 : f32 to vector<16x128xf32>
    %27 = arith.maximumf %25, %26 : vector<16x128xf32>
    %cst_22 = arith.constant 0.000000e+00 : f32
    %28 = vector.broadcast %cst_22 : f32 to vector<1x128xf32>
    %c0_23 = arith.constant 0 : index
    %c0_24 = arith.constant 0 : index
    %29 = vector.load %arg9[%c0_23, %c0_24] : memref<18x128xf32, #tpu.memory_space<vmem>>, vector<1x128xf32>
    tpu.vector_store %arg9[%c0_23, %c0_24], %28 {strides = array<i32>} : memref<18x128xf32, #tpu.memory_space<vmem>>, vector<1x128xf32>,
    %cst_25 = arith.constant 0.000000e+00 : f32
    %30 = vector.broadcast %cst_25 : f32 to vector<1x128xf32>
    %c17 = arith.constant 17 : index
    %c0_26 = arith.constant 0 : index
    %31 = vector.load %arg9[%c17, %c0_26] : memref<18x128xf32, #tpu.memory_space<vmem>>, vector<1x128xf32>
    tpu.vector_store %arg9[%c17, %c0_26], %30 {strides = array<i32>} : memref<18x128xf32, #tpu.memory_space<vmem>>, vector<1x128xf32>,
    %c1_27 = arith.constant 1 : index
    %c0_28 = arith.constant 0 : index
    %32 = vector.load %arg9[%c1_27, %c0_28] : memref<18x128xf32, #tpu.memory_space<vmem>>, vector<16x128xf32>
    tpu.vector_store %arg9[%c1_27, %c0_28], %27 {strides = array<i32>} : memref<18x128xf32, #tpu.memory_space<vmem>>, vector<16x128xf32>,
    %c0_29 = arith.constant 0 : index
    %c0_30 = arith.constant 0 : index
    %33 = vector.load %arg9[%c0_29, %c0_30] : memref<18x128xf32, #tpu.memory_space<vmem>>, vector<16x128xf32>
    %34 = arith.truncf %33 : vector<16x128xf32> to vector<16x128xbf16>
    %c0_31 = arith.constant 0 : index
    %c0_32 = arith.constant 0 : index
    %c0_33 = arith.constant 0 : index
    %35 = vector.load %arg5[%c0_31, %c0_32, %c0_33] : memref<3x128x128xbf16, #tpu.memory_space<vmem>>, vector<1x128x128xbf16>
    %36 = vector.shape_cast %35 : vector<1x128x128xbf16> to vector<128x128xbf16>
    %cst_34 = arith.constant dense<0.000000e+00> : vector<16x128xf32>
    %37 = tpu.matmul %34, %36, %cst_34 {dimension_numbers = #tpu.dot_dimension_numbers<[1], [0], [0], [1], [0, 0, 1, 1], [], []>} : vector<16x128xbf16>, vector<128x128xbf16>, vector<16x128xf32> -> vector<16x128xf32>
    %c1_35 = arith.constant 1 : index
    %c0_36 = arith.constant 0 : index
    %38 = vector.load %arg9[%c1_35, %c0_36] : memref<18x128xf32, #tpu.memory_space<vmem>>, vector<16x128xf32>
    %39 = arith.truncf %38 : vector<16x128xf32> to vector<16x128xbf16>
    %c1_37 = arith.constant 1 : index
    %c0_38 = arith.constant 0 : index
    %c0_39 = arith.constant 0 : index
    %40 = vector.load %arg5[%c1_37, %c0_38, %c0_39] : memref<3x128x128xbf16, #tpu.memory_space<vmem>>, vector<1x128x128xbf16>
    %41 = vector.shape_cast %40 : vector<1x128x128xbf16> to vector<128x128xbf16>
    %cst_40 = arith.constant dense<0.000000e+00> : vector<16x128xf32>
    %42 = tpu.matmul %39, %41, %cst_40 {dimension_numbers = #tpu.dot_dimension_numbers<[1], [0], [0], [1], [0, 0, 1, 1], [], []>} : vector<16x128xbf16>, vector<128x128xbf16>, vector<16x128xf32> -> vector<16x128xf32>
    %43 = arith.addf %37, %42 : vector<16x128xf32>
    %c2_41 = arith.constant 2 : index
    %c0_42 = arith.constant 0 : index
    %44 = vector.load %arg9[%c2_41, %c0_42] : memref<18x128xf32, #tpu.memory_space<vmem>>, vector<16x128xf32>
    %45 = arith.truncf %44 : vector<16x128xf32> to vector<16x128xbf16>
    %c2_43 = arith.constant 2 : index
    %c0_44 = arith.constant 0 : index
    %c0_45 = arith.constant 0 : index
    %46 = vector.load %arg5[%c2_43, %c0_44, %c0_45] : memref<3x128x128xbf16, #tpu.memory_space<vmem>>, vector<1x128x128xbf16>
    %47 = vector.shape_cast %46 : vector<1x128x128xbf16> to vector<128x128xbf16>
    %cst_46 = arith.constant dense<0.000000e+00> : vector<16x128xf32>
    %48 = tpu.matmul %45, %47, %cst_46 {dimension_numbers = #tpu.dot_dimension_numbers<[1], [0], [0], [1], [0, 0, 1, 1], [], []>} : vector<16x128xbf16>, vector<128x128xbf16>, vector<16x128xf32> -> vector<16x128xf32>
    %49 = arith.addf %43, %48 : vector<16x128xf32>
    %c0_47 = arith.constant 0 : index
    %c1_48 = arith.constant 1 : index
    %c0_49 = arith.constant 0 : index
    %50 = vector.load %arg1[%c0_47, %c1_48, %c0_49] : memref<1x18x128xf32, #tpu.memory_space<vmem>>, vector<1x16x128xf32>
    %51 = vector.shape_cast %50 : vector<1x16x128xf32> to vector<16x128xf32>
    %c0_50 = arith.constant 0 : index
    %c0_51 = arith.constant 0 : index
    %52 = vector.load %arg6[%c0_50, %c0_51] : memref<1x128xf32, #tpu.memory_space<vmem>>, vector<1x128xf32>
    %53 = vector.broadcast %52 : vector<1x128xf32> to vector<16x128xf32>
    %54 = arith.mulf %49, %53 : vector<16x128xf32>
    %c0_52 = arith.constant 0 : index
    %c0_53 = arith.constant 0 : index
    %55 = vector.load %arg7[%c0_52, %c0_53] : memref<1x128xf32, #tpu.memory_space<vmem>>, vector<1x128xf32>
    %56 = vector.broadcast %55 : vector<1x128xf32> to vector<16x128xf32>
    %57 = arith.addf %54, %56 : vector<16x128xf32>
    %58 = arith.addf %57, %51 : vector<16x128xf32>
    %cst_54 = arith.constant 0.000000e+00 : f32
    %59 = vector.broadcast %cst_54 : f32 to vector<16x128xf32>
    %60 = arith.maximumf %58, %59 : vector<16x128xf32>
    %c0_55 = arith.constant 0 : index
    %c0_56 = arith.constant 0 : index
    %c0_57 = arith.constant 0 : index
    %61 = vector.load %arg8[%c0_55, %c0_56, %c0_57] : memref<1x16x128xf32, #tpu.memory_space<vmem>>, vector<1x16x128xf32>
    %62 = vector.shape_cast %61 : vector<1x16x128xf32> to vector<16x128xf32>
    %63 = vector.shape_cast %60 : vector<16x128xf32> to vector<1x16x128xf32>
    tpu.vector_store %arg8[%c0_55, %c0_56, %c0_57], %63 {strides = array<i32>} : memref<1x16x128xf32, #tpu.memory_space<vmem>>, vector<1x16x128xf32>,
    return
  }
  func.func @transform_0(%arg0: i32) -> (i32, i32, i32) {
    %c0_i32 = arith.constant 0 : i32
    %c0_i32_0 = arith.constant 0 : i32
    %c0_i32_1 = arith.constant 0 : i32
    return %arg0, %c0_i32, %c0_i32_0 : i32, i32, i32
  }
  func.func @transform_1(%arg0: i32) -> (i32, i32, i32) {
    %c0_i32 = arith.constant 0 : i32
    %c0_i32_0 = arith.constant 0 : i32
    %c0_i32_1 = arith.constant 0 : i32
    %c0_i32_2 = arith.constant 0 : i32
    return %c0_i32, %c0_i32_0, %c0_i32_1 : i32, i32, i32
  }
  func.func @transform_2(%arg0: i32) -> (i32, i32) {
    %c0_i32 = arith.constant 0 : i32
    %c0_i32_0 = arith.constant 0 : i32
    %c0_i32_1 = arith.constant 0 : i32
    return %c0_i32, %c0_i32_0 : i32, i32
  }
  func.func @transform_3(%arg0: i32) -> (i32, i32) {
    %c0_i32 = arith.constant 0 : i32
    %c0_i32_0 = arith.constant 0 : i32
    %c0_i32_1 = arith.constant 0 : i32
    return %c0_i32, %c0_i32_0 : i32, i32
  }
  func.func @transform_4(%arg0: i32) -> (i32, i32, i32) {
    %c0_i32 = arith.constant 0 : i32
    %c0_i32_0 = arith.constant 0 : i32
    %c0_i32_1 = arith.constant 0 : i32
    %c0_i32_2 = arith.constant 0 : i32
    return %c0_i32, %c0_i32_0, %c0_i32_1 : i32, i32, i32
  }
  func.func @transform_5(%arg0: i32) -> (i32, i32) {
    %c0_i32 = arith.constant 0 : i32
    %c0_i32_0 = arith.constant 0 : i32
    %c0_i32_1 = arith.constant 0 : i32
    return %c0_i32, %c0_i32_0 : i32, i32
  }
  func.func @transform_6(%arg0: i32) -> (i32, i32) {
    %c0_i32 = arith.constant 0 : i32
    %c0_i32_0 = arith.constant 0 : i32
    %c0_i32_1 = arith.constant 0 : i32
    return %c0_i32, %c0_i32_0 : i32, i32
  }
  func.func @transform_7(%arg0: i32) -> (i32, i32, i32) {
    %c0_i32 = arith.constant 0 : i32
    %c0_i32_0 = arith.constant 0 : i32
    %c0_i32_1 = arith.constant 0 : i32
    return %arg0, %c0_i32, %c0_i32_0 : i32, i32, i32
  }
}

</mosaic_0001>

<llo_original>
// kernel: tpu_custom_call.1
$region0: #{tpu_custom_call.1}
  #allocation0 [shape = 'u32[]', space=smem, size = 0x4, offset = 0x4, fixed_abs, tag = 'smem constant byte address 0x4 - core index']
  #allocation1 [shape = 'u32[72,128]{1,0:T(1,128)}', space=vmem, size = 0x9000, scoped, tag = 'internal scratch']
  #allocation2 [shape = 'f32[18,128]{1,0:T(8,128)}', space=vmem, size = 0x3000, scoped, tag = 'scratch operand']
  %s0 = inlined_call_operand.vmem [shape: f32[2,18,128], index: 0, kind: input, shape index: {}]
  %s1 = inlined_call_operand.hbm [shape: bf16[3,128,128], index: 1, kind: input, shape index: {}]
  %s2 = inlined_call_operand.vmem [shape: f32[1,128], index: 2, kind: input, shape index: {}]
  %s3 = inlined_call_operand.vmem [shape: f32[1,128], index: 3, kind: input, shape index: {}]
  %s4 = inlined_call_operand.hbm [shape: bf16[3,128,128], index: 4, kind: input, shape index: {}]
  %s5 = inlined_call_operand.vmem [shape: f32[1,128], index: 5, kind: input, shape index: {}]
  %s6 = inlined_call_operand.vmem [shape: f32[1,128], index: 6, kind: input, shape index: {}]
  %s7 = inlined_call_operand.hbm [shape: f32[2,16,128], index: 7, kind: output, shape index: {}]
  %s8 = sld [smem:[#allocation0]]
  $region69: #{tpu_custom_call.1} parent=0
    _
  %s10 = ssub.s32 1, %s8
  %s11 = scalar_select 0, %s10, %s8
  $region1: #{tpu_custom_call.1} parent=0
    #allocation3 [shape = 'u8[98304]{0}', space=vmem, size = 0x18000, scoped, tag = 'input window, operand 1, single buffered']
    #allocation4 [shape = 's32[2]{0}', space=sflag, size = 0x8, scoped, tag = 'scoped memory for tpu_custom_call.1']
    #allocation5 [shape = 's32[2]{0}', space=sflag, size = 0x8, scoped, tag = 'scoped memory for tpu_custom_call.1']
    #allocation6 [shape = 'u8[98304]{0}', space=vmem, size = 0x18000, scoped, tag = 'input window, operand 4, single buffered']
    #allocation7 [shape = 's32[1]{0}', space=sflag, size = 0x4, scoped, tag = 'scoped memory for tpu_custom_call.1']
    #allocation8 [shape = 'u8[16384]{0}', space=vmem, size = 0x4000, scoped, tag = 'output window, operand 0']
    %12 = vsyncpa [#allocation4], 0
    %13 = vsyncpa [#allocation7], 0
    %14 = vsyncpa [#allocation5], 0
    %s15 = scalar_lea.sflag [#allocation5], 1
    %16 = vsyncpa %s15, 0
    loop: start=0, step=1, limit=4
    $region2: #{tpu_custom_call.1} parent=1 // loop_pre_header
      _
    $region3: #{tpu_custom_call.1} parent=1 // loop_header
      %s18 = sphi 0, %s22
      %p19 = scmp.ge.s32.totalorder %s18, 4
      %s28 = sphi 0, %s30
      %s31 = sphi 0, %s28
      %s32 = sphi 0, %s31
      %s48 = sphi 0, %s32
      %s52 = sphi 0, %s52
      %s54 = sphi 0, %s52
      %s55 = sphi 0, %s54
      %s69 = sphi 0, %s55
      %s73 = sphi 0, %s73
      %s75 = sphi 0, %s73
      %s76 = sphi 0, %s75
      %s90 = sphi 0, %s76
      %s94 = sphi 0, %s94
      %s96 = sphi 0, %s94
      %s97 = sphi 0, %s96
      %s111 = sphi 0, %s97
      %s115 = sphi 0, %s115
      %s117 = sphi 0, %s115
      %s118 = sphi 0, %s117
      %s132 = sphi 0, %s118
      %s136 = sphi 0, %s136
      %s138 = sphi 0, %s136
      %s139 = sphi 0, %s138
      %s153 = sphi 0, %s139
      %s157 = sphi 0, %s157
      %s159 = sphi 0, %s157
      %s160 = sphi 0, %s159
      %s174 = sphi 0, %s160
      %s180 = sphi 0, %s182
      %s183 = sphi 0, %s180
      %s184 = sphi 0, %s183
      %s200 = sphi 0, %s184
    $region4: #{tpu_custom_call.1} parent=1 // loop_header_branch
      %21 = sbr.rel (%p19) target = $region8
    $region5: #{tpu_custom_call.1} parent=1 // loop_body
      %s23 = ssub.s32 %s18, 1
      %s24 = ssub.s32 %s18, 2
      %s25 = sadd.s32 %s18, 1
      %s26 = ssub.s32 %s18, %s25
      %p27 = scmp.eq.s32.totalorder %s26, 0
      %s29 = sadd.s32 %s28, 1
      %s30 = scalar_select %p27, %s28, %s29
      %p33 = pneg %p27
      %p34 = scmp.eq.s32.totalorder %s18, 1
      %p35 = por %p33, %p34
      %p36 = scmp.ne.s32.totalorder %s28, %s31
      %p37 = scmp.eq.s32.totalorder %s18, 0
      %p38 = por %p36, %p37
      %p39 = scmp.ne.s32.totalorder %s28, %s31
      %p40 = scmp.eq.s32.totalorder %s23, 1
      %p41 = por %p39, %p40
      %p42 = scmp.ne.s32.totalorder %s31, %s32
      %p43 = scmp.eq.s32.totalorder %s23, 0
      %p44 = por %p42, %p43
      %p45 = scmp.ne.s32.totalorder %s31, %s32
      %p46 = scmp.eq.s32.totalorder %s24, 1
      %p47 = por %p45, %p46
      %p49 = scmp.ne.s32.totalorder %s32, %s48
      %p50 = scmp.eq.s32.totalorder %s24, 0
      %p51 = por %p49, %p50
      %s53 = sadd.s32 %s52, 1
      %p56 = scmp.eq.s32.totalorder %s18, 1
      %p57 = scmp.ne.s32.totalorder %s52, %s54
      %p58 = scmp.eq.s32.totalorder %s18, 0
      %p59 = por %p57, %p58
      %p60 = scmp.ne.s32.totalorder %s52, %s54
      %p61 = scmp.eq.s32.totalorder %s23, 1
      %p62 = por %p60, %p61
      %p63 = scmp.ne.s32.totalorder %s54, %s55
      %p64 = scmp.eq.s32.totalorder %s23, 0
      %p65 = por %p63, %p64
      %p66 = scmp.ne.s32.totalorder %s54, %s55
      %p67 = scmp.eq.s32.totalorder %s24, 1
      %p68 = por %p66, %p67
      %p70 = scmp.ne.s32.totalorder %s55, %s69
      %p71 = scmp.eq.s32.totalorder %s24, 0
      %p72 = por %p70, %p71
      %s74 = sadd.s32 %s73, 1
      %p77 = scmp.eq.s32.totalorder %s18, 1
      %p78 = scmp.ne.s32.totalorder %s73, %s75
      %p79 = scmp.eq.s32.totalorder %s18, 0
      %p80 = por %p78, %p79
      %p81 = scmp.ne.s32.totalorder %s73, %s75
      %p82 = scmp.eq.s32.totalorder %s23, 1
      %p83 = por %p81, %p82
      %p84 = scmp.ne.s32.totalorder %s75, %s76
      %p85 = scmp.eq.s32.totalorder %s23, 0
      %p86 = por %p84, %p85
      %p87 = scmp.ne.s32.totalorder %s75, %s76
      %p88 = scmp.eq.s32.totalorder %s24, 1
      %p89 = por %p87, %p88
      %p91 = scmp.ne.s32.totalorder %s76, %s90
      %p92 = scmp.eq.s32.totalorder %s24, 0
      %p93 = por %p91, %p92
      %s95 = sadd.s32 %s94, 1
      %p98 = scmp.eq.s32.totalorder %s18, 1
      %p99 = scmp.ne.s32.totalorder %s94, %s96
      %p100 = scmp.eq.s32.totalorder %s18, 0
      %p101 = por %p99, %p100
      %p102 = scmp.ne.s32.totalorder %s94, %s96
      %p103 = scmp.eq.s32.totalorder %s23, 1
      %p104 = por %p102, %p103
      %p105 = scmp.ne.s32.totalorder %s96, %s97
      %p106 = scmp.eq.s32.totalorder %s23, 0
      %p107 = por %p105, %p106
      %p108 = scmp.ne.s32.totalorder %s96, %s97
      %p109 = scmp.eq.s32.totalorder %s24, 1
      %p110 = por %p108, %p109
      %p112 = scmp.ne.s32.totalorder %s97, %s111
      %p113 = scmp.eq.s32.totalorder %s24, 0
      %p114 = por %p112, %p113
      %s116 = sadd.s32 %s115, 1
      %p119 = scmp.eq.s32.totalorder %s18, 1
      %p120 = scmp.ne.s32.totalorder %s115, %s117
      %p121 = scmp.eq.s32.totalorder %s18, 0
      %p122 = por %p120, %p121
      %p123 = scmp.ne.s32.totalorder %s115, %s117
      %p124 = scmp.eq.s32.totalorder %s23, 1
      %p125 = por %p123, %p124
      %p126 = scmp.ne.s32.totalorder %s117, %s118
      %p127 = scmp.eq.s32.totalorder %s23, 0
      %p128 = por %p126, %p127
      %p129 = scmp.ne.s32.totalorder %s117, %s118
      %p130 = scmp.eq.s32.totalorder %s24, 1
      %p131 = por %p129, %p130
      %p133 = scmp.ne.s32.totalorder %s118, %s132
      %p134 = scmp.eq.s32.totalorder %s24, 0
      %p135 = por %p133, %p134
      %s137 = sadd.s32 %s136, 1
      %p140 = scmp.eq.s32.totalorder %s18, 1
      %p141 = scmp.ne.s32.totalorder %s136, %s138
      %p142 = scmp.eq.s32.totalorder %s18, 0
      %p143 = por %p141, %p142
      %p144 = scmp.ne.s32.totalorder %s136, %s138
      %p145 = scmp.eq.s32.totalorder %s23, 1
      %p146 = por %p144, %p145
      %p147 = scmp.ne.s32.totalorder %s138, %s139
      %p148 = scmp.eq.s32.totalorder %s23, 0
      %p149 = por %p147, %p148
      %p150 = scmp.ne.s32.totalorder %s138, %s139
      %p151 = scmp.eq.s32.totalorder %s24, 1
      %p152 = por %p150, %p151
      %p154 = scmp.ne.s32.totalorder %s139, %s153
      %p155 = scmp.eq.s32.totalorder %s24, 0
      %p156 = por %p154, %p155
      %s158 = sadd.s32 %s157, 1
      %p161 = scmp.eq.s32.totalorder %s18, 1
      %p162 = scmp.ne.s32.totalorder %s157, %s159
      %p163 = scmp.eq.s32.totalorder %s18, 0
      %p164 = por %p162, %p163
      %p165 = scmp.ne.s32.totalorder %s157, %s159
      %p166 = scmp.eq.s32.totalorder %s23, 1
      %p167 = por %p165, %p166
      %p168 = scmp.ne.s32.totalorder %s159, %s160
      %p169 = scmp.eq.s32.totalorder %s23, 0
      %p170 = por %p168, %p169
      %p171 = scmp.ne.s32.totalorder %s159, %s160
      %p172 = scmp.eq.s32.totalorder %s24, 1
      %p173 = por %p171, %p172
      %p175 = scmp.ne.s32.totalorder %s160, %s174
      %p176 = scmp.eq.s32.totalorder %s24, 0
      %p177 = por %p175, %p176
      %s178 = ssub.s32 %s18, %s25
      %p179 = scmp.eq.s32.totalorder %s178, 0
      %s181 = sadd.s32 %s180, 1
      %s182 = scalar_select %p179, %s180, %s181
      %p185 = pneg %p179
      %p186 = scmp.eq.s32.totalorder %s18, 1
      %p187 = por %p185, %p186
      %p188 = scmp.ne.s32.totalorder %s180, %s183
      %p189 = scmp.eq.s32.totalorder %s18, 0
      %p190 = por %p188, %p189
      %p191 = scmp.ne.s32.totalorder %s180, %s183
      %p192 = scmp.eq.s32.totalorder %s23, 1
      %p193 = por %p191, %p192
      %p194 = scmp.ne.s32.totalorder %s183, %s184
      %p195 = scmp.eq.s32.totalorder %s23, 0
      %p196 = por %p194, %p195
      %p197 = scmp.ne.s32.totalorder %s183, %s184
      %p198 = scmp.eq.s32.totalorder %s24, 1
      %p199 = por %p197, %p198
      %p201 = scmp.ne.s32.totalorder %s184, %s200
      %p202 = scmp.eq.s32.totalorder %s24, 0
      %p203 = por %p201, %p202
      %p204 = scmp.le.s32.totalorder 1, %s18
      %p205 = scmp.lt.s32.totalorder %s18, 3
      %p206 = pnand %p204, %p205
      %p207 = pneg %p206
      // Predicated region
      $region9: #{tpu_custom_call.1} parent=5 // pred_check
        _
      $region10: #{tpu_custom_call.1} parent=5 // pred_check_branch
        %209 = sbr.rel (%p206) target = $region12
      $region11: #{tpu_custom_call.1} parent=5 // pred_region
        %s210 = ssub.s32 %s18, 1
        // Predicated region
        $region13: #{tpu_custom_call.1} parent=11 // pred_check
          %p211 = pneg %p65
        $region14: #{tpu_custom_call.1} parent=11 // pred_check_branch
          %213 = sbr.rel (%p211) target = $region16
        $region15: #{tpu_custom_call.1} parent=11 // pred_region
          %215 = vsyncadd [#allocation4], 0
          %s216 = sshll.u32 %s1, 4
          %s217 = int_to_ptr.hbm [resolvable:$true] %s216
          %s218 = sshll.u32 [#allocation3], 4
          %s219 = int_to_ptr.vmem [resolvable:$true] %s218
          %224 = dma.hbm_to_vmem [thread:$0]  %s217, 3072, %s219, [#allocation4], 64, 64, 4
        $region16: #{tpu_custom_call.1} parent=11 // pred_fallthru
          _
        // Predicated region
        $region17: #{tpu_custom_call.1} parent=11 // pred_check
          %p225 = pneg %p86
        $region18: #{tpu_custom_call.1} parent=11 // pred_check_branch
          %227 = sbr.rel (%p225) target = $region20
        $region19: #{tpu_custom_call.1} parent=11 // pred_region
          _
        $region20: #{tpu_custom_call.1} parent=11 // pred_fallthru
          _
        // Predicated region
        $region21: #{tpu_custom_call.1} parent=11 // pred_check
          %p228 = pneg %p107
        $region22: #{tpu_custom_call.1} parent=11 // pred_check_branch
          %230 = sbr.rel (%p228) target = $region24
        $region23: #{tpu_custom_call.1} parent=11 // pred_region
          _
        $region24: #{tpu_custom_call.1} parent=11 // pred_fallthru
          _
        // Predicated region
        $region25: #{tpu_custom_call.1} parent=11 // pred_check
          %p231 = pneg %p128
        $region26: #{tpu_custom_call.1} parent=11 // pred_check_branch
          %233 = sbr.rel (%p231) target = $region28
        $region27: #{tpu_custom_call.1} parent=11 // pred_region
          %235 = vsyncadd [#allocation7], 0
          %s236 = sshll.u32 %s4, 4
          %s237 = int_to_ptr.hbm [resolvable:$true] %s236
          %s238 = sshll.u32 [#allocation6], 4
          %s239 = int_to_ptr.vmem [resolvable:$true] %s238
          %244 = dma.hbm_to_vmem [thread:$0]  %s237, 3072, %s239, [#allocation7], 64, 64, 4
        $region28: #{tpu_custom_call.1} parent=11 // pred_fallthru
          _
        // Predicated region
        $region29: #{tpu_custom_call.1} parent=11 // pred_check
          %p245 = pneg %p149
        $region30: #{tpu_custom_call.1} parent=11 // pred_check_branch
          %247 = sbr.rel (%p245) target = $region32
        $region31: #{tpu_custom_call.1} parent=11 // pred_region
          _
        $region32: #{tpu_custom_call.1} parent=11 // pred_fallthru
          _
        // Predicated region
        $region33: #{tpu_custom_call.1} parent=11 // pred_check
          %p248 = pneg %p170
        $region34: #{tpu_custom_call.1} parent=11 // pred_check_branch
          %250 = sbr.rel (%p248) target = $region36
        $region35: #{tpu_custom_call.1} parent=11 // pred_region
          _
        $region36: #{tpu_custom_call.1} parent=11 // pred_fallthru
          _
      $region12: #{tpu_custom_call.1} parent=5 // pred_fallthru
        _
      %p251 = scmp.lt.s32.totalorder %s18, 2
      // Predicated region
      $region37: #{tpu_custom_call.1} parent=5 // pred_check
        %p252 = pneg %p251
      $region38: #{tpu_custom_call.1} parent=5 // pred_check_branch
        %254 = sbr.rel (%p252) target = $region40
      $region39: #{tpu_custom_call.1} parent=5 // pred_region
        // Predicated region
        $region41: #{tpu_custom_call.1} parent=39 // pred_check
          %p255 = pneg %p38
        $region42: #{tpu_custom_call.1} parent=39 // pred_check_branch
          %257 = sbr.rel (%p255) target = $region44
        $region43: #{tpu_custom_call.1} parent=39 // pred_region
          %p258 = scmp.lt.s32.totalorder %s18, 1
          %s259 = scalar_select %p258, %s18, 1
          %s260 = smul.addr %s259, 3
          %s261 = smul.addr %s260, 8
          %s262 = scalar_lea.vmem %s0, %s261
        $region44: #{tpu_custom_call.1} parent=39 // pred_fallthru
          _
      $region40: #{tpu_custom_call.1} parent=5 // pred_fallthru
        _
      %p263 = scmp.le.s32.totalorder 1, %s18
      %p264 = scmp.lt.s32.totalorder %s18, 3
      %p265 = pnand %p263, %p264
      %p266 = pneg %p265
      // Predicated region
      $region45: #{tpu_custom_call.1} parent=5 // pred_check
        _
      $region46: #{tpu_custom_call.1} parent=5 // pred_check_branch
        %268 = sbr.rel (%p265) target = $region48
      $region47: #{tpu_custom_call.1} parent=5 // pred_region
        %s269 = ssub.s32 %s18, 1
        // Predicated region
        $region49: #{tpu_custom_call.1} parent=47 // pred_check
          %p270 = pneg %p65
        $region50: #{tpu_custom_call.1} parent=47 // pred_check_branch
          %272 = sbr.rel (%p270) target = $region52
        $region51: #{tpu_custom_call.1} parent=47 // pred_region
          %274 = dma.done [#allocation4], 3072
        $region52: #{tpu_custom_call.1} parent=47 // pred_fallthru
          _
        // Predicated region
        $region53: #{tpu_custom_call.1} parent=47 // pred_check
          %p275 = pneg %p128
        $region54: #{tpu_custom_call.1} parent=47 // pred_check_branch
          %277 = sbr.rel (%p275) target = $region56
        $region55: #{tpu_custom_call.1} parent=47 // pred_region
          %279 = dma.done [#allocation7], 3072
        $region56: #{tpu_custom_call.1} parent=47 // pred_fallthru
          _
        %p280 = scmp.lt.s32.totalorder %s23, 1
        %s281 = scalar_select %p280, %s23, 1
        %s282 = smul.addr %s281, 3
        %s283 = smul.addr %s282, 8
        %s284 = scalar_lea.vmem %s0, %s283
        %p285 = pneg %p44
        %p286 = pneg %p41
        %p287 = pneg %p65
        %p288 = pneg %p62
        %p289 = pneg %p86
        %p290 = pneg %p83
        %p291 = pneg %p107
        %p292 = pneg %p104
        %p293 = pneg %p128
        %p294 = pneg %p125
        %p295 = pneg %p149
        %p296 = pneg %p146
        %p297 = pneg %p170
        %p298 = pneg %p167
        %p299 = pneg %p196
        %p300 = pneg %p193
        %s301 = sand.u32 %s183, 1
        %s302 = scalar_lea.sflag [#allocation5], %s301
        %s303 = sand.u32 %s183, 1
        %s304 = smul.addr %s303, 16
        %s305 = scalar_lea.vmem [#allocation8], %s304
        %p306 = scmp.lt.s32.totalorder %s23, 1
        %s307 = scalar_select %p306, %s23, 1
        %s308 = smul.addr %s307, 3
        %s309 = smul.addr %s308, 8
        %s310 = scalar_lea.vmem %s0, %s309
        %v311 = vld [vmem:[%s310] sm:$0xff]
        %v312 = vld [vmem:[%s310 + $0x8] sm:$0xff]
        %v313 = vpack.c.bf16 %v312, %v311
        %v314 = vld [vmem:[#allocation3] sm:$0xf]
        %v315 = vld [vmem:[#allocation3 + $0x4] sm:$0xf]
        %v316 = vld [vmem:[#allocation3 + $0x8] sm:$0xf]
        %v317 = vld [vmem:[#allocation3 + $0xc] sm:$0xf]
        %v318 = vld [vmem:[#allocation3 + $0x10] sm:$0xf]
        %v319 = vld [vmem:[#allocation3 + $0x14] sm:$0xf]
        %v320 = vld [vmem:[#allocation3 + $0x18] sm:$0xf]
        %v321 = vld [vmem:[#allocation3 + $0x1c] sm:$0xf]
        %v322 = vld [vmem:[#allocation3 + $0x20] sm:$0xf]
        %v323 = vld [vmem:[#allocation3 + $0x24] sm:$0xf]
        %v324 = vld [vmem:[#allocation3 + $0x28] sm:$0xf]
        %v325 = vld [vmem:[#allocation3 + $0x2c] sm:$0xf]
        %v326 = vld [vmem:[#allocation3 + $0x30] sm:$0xf]
        %v327 = vld [vmem:[#allocation3 + $0x34] sm:$0xf]
        %v328 = vld [vmem:[#allocation3 + $0x38] sm:$0xf]
        %v329 = vld [vmem:[#allocation3 + $0x3c] sm:$0xf]
        %v330 = vld [vmem:[%s310 + $0x1] sm:$0xff]
        %v331 = vld [vmem:[%s310 + $0x9] sm:$0xff]
        %v332 = vpack.c.bf16 %v331, %v330
        %s333 = scalar_lea.vmem [#allocation3], 64
        %v334 = vld [vmem:[%s333] sm:$0xf]
        %v335 = vld [vmem:[%s333 + $0x4] sm:$0xf]
        %v336 = vld [vmem:[%s333 + $0x8] sm:$0xf]
        %v337 = vld [vmem:[%s333 + $0xc] sm:$0xf]
        %v338 = vld [vmem:[%s333 + $0x10] sm:$0xf]
        %v339 = vld [vmem:[%s333 + $0x14] sm:$0xf]
        %v340 = vld [vmem:[%s333 + $0x18] sm:$0xf]
        %v341 = vld [vmem:[%s333 + $0x1c] sm:$0xf]
        %v342 = vld [vmem:[%s333 + $0x20] sm:$0xf]
        %v343 = vld [vmem:[%s333 + $0x24] sm:$0xf]
        %v344 = vld [vmem:[%s333 + $0x28] sm:$0xf]
        %v345 = vld [vmem:[%s333 + $0x2c] sm:$0xf]
        %v346 = vld [vmem:[%s333 + $0x30] sm:$0xf]
        %v347 = vld [vmem:[%s333 + $0x34] sm:$0xf]
        %v348 = vld [vmem:[%s333 + $0x38] sm:$0xf]
        %v349 = vld [vmem:[%s333 + $0x3c] sm:$0xf]
        %v366 = vunpack.c.l.b16 %v334
        %v367 = vunpack.c.l.b16 %v335
        %v368 = vunpack.c.l.b16 %v336
        %v369 = vunpack.c.l.b16 %v337
        %v370 = vunpack.c.l.b16 %v338
        %v371 = vunpack.c.l.b16 %v339
        %v372 = vunpack.c.l.b16 %v340
        %v373 = vunpack.c.l.b16 %v341
        %v374 = vunpack.c.l.b16 %v342
        %v375 = vunpack.c.l.b16 %v343
        %v376 = vunpack.c.l.b16 %v344
        %v377 = vunpack.c.l.b16 %v345
        %v378 = vunpack.c.l.b16 %v346
        %v379 = vunpack.c.l.b16 %v347
        %v380 = vunpack.c.l.b16 %v348
        %v381 = vunpack.c.l.b16 %v349
        %v382 = vpack.c.b16 %v367, %v366
        %v383 = vpack.c.b16 %v369, %v368
        %v384 = vpack.c.b16 %v371, %v370
        %v385 = vpack.c.b16 %v373, %v372
        %v386 = vpack.c.b16 %v375, %v374
        %v387 = vpack.c.b16 %v377, %v376
        %v388 = vpack.c.b16 %v379, %v378
        %v389 = vpack.c.b16 %v381, %v380
        %398 = vmatpush.bf16.msra.mxu0 %v389
        %399 = vmatpush.bf16.msra.mxu0 %v388
        %400 = vmatpush.bf16.msra.mxu0 %v387
        %401 = vmatpush.bf16.msra.mxu0 %v386
        %402 = vmatpush.bf16.msra.mxu0 %v385
        %403 = vmatpush.bf16.msra.mxu0 %v384
        %404 = vmatpush.bf16.msra.mxu0 %v383
        %405 = vmatpush.bf16.msra.mxu0 %v382
        %406 = vmatmul.bf16.gmra.mxu0 %v332
        %v407 = vpop.f32.mrf.mxu0
        %v408 = vadd.f32 0.0, %v407
        %v409 = vpop.f32.mrf.mxu0
        %v410 = vadd.f32 0.0, %v409
        %411 = vdwg.mxu0
        %v428 = vunpack.c.l.b16 %v314
        %v429 = vunpack.c.l.b16 %v315
        %v430 = vunpack.c.l.b16 %v316
        %v431 = vunpack.c.l.b16 %v317
        %v432 = vunpack.c.l.b16 %v318
        %v433 = vunpack.c.l.b16 %v319
        %v434 = vunpack.c.l.b16 %v320
        %v435 = vunpack.c.l.b16 %v321
        %v436 = vunpack.c.l.b16 %v322
        %v437 = vunpack.c.l.b16 %v323
        %v438 = vunpack.c.l.b16 %v324
        %v439 = vunpack.c.l.b16 %v325
        %v440 = vunpack.c.l.b16 %v326
        %v441 = vunpack.c.l.b16 %v327
        %v442 = vunpack.c.l.b16 %v328
        %v443 = vunpack.c.l.b16 %v329
        %v444 = vpack.c.b16 %v429, %v428
        %v445 = vpack.c.b16 %v431, %v430
        %v446 = vpack.c.b16 %v433, %v432
        %v447 = vpack.c.b16 %v435, %v434
        %v448 = vpack.c.b16 %v437, %v436
        %v449 = vpack.c.b16 %v439, %v438
        %v450 = vpack.c.b16 %v441, %v440
        %v451 = vpack.c.b16 %v443, %v442
        %460 = vmatpush.bf16.msra.mxu0 %v451
        %461 = vmatpush.bf16.msra.mxu0 %v450
        %462 = vmatpush.bf16.msra.mxu0 %v449
        %463 = vmatpush.bf16.msra.mxu0 %v448
        %464 = vmatpush.bf16.msra.mxu0 %v447
        %465 = vmatpush.bf16.msra.mxu0 %v446
        %466 = vmatpush.bf16.msra.mxu0 %v445
        %467 = vmatpush.bf16.msra.mxu0 %v444
        %468 = vmatmul.bf16.gmra.mxu0 %v313
        %v469 = vpop.f32.mrf.mxu0
        %v470 = vadd.f32 %v408, %v469
        %v471 = vpop.f32.mrf.mxu0
        %v472 = vadd.f32 %v410, %v471
        %473 = vdwg.mxu0
        %v474 = vld [vmem:[%s310 + $0x2] sm:$0xff]
        %v475 = vld [vmem:[%s310 + $0xa] sm:$0xff]
        %v476 = vpack.c.bf16 %v475, %v474
        %s477 = scalar_lea.vmem [#allocation3], 128
        %v478 = vld [vmem:[%s477] sm:$0xf]
        %v479 = vld [vmem:[%s477 + $0x4] sm:$0xf]
        %v480 = vld [vmem:[%s477 + $0x8] sm:$0xf]
        %v481 = vld [vmem:[%s477 + $0xc] sm:$0xf]
        %v482 = vld [vmem:[%s477 + $0x10] sm:$0xf]
        %v483 = vld [vmem:[%s477 + $0x14] sm:$0xf]
        %v484 = vld [vmem:[%s477 + $0x18] sm:$0xf]
        %v485 = vld [vmem:[%s477 + $0x1c] sm:$0xf]
        %v486 = vld [vmem:[%s477 + $0x20] sm:$0xf]
        %v487 = vld [vmem:[%s477 + $0x24] sm:$0xf]
        %v488 = vld [vmem:[%s477 + $0x28] sm:$0xf]
        %v489 = vld [vmem:[%s477 + $0x2c] sm:$0xf]
        %v490 = vld [vmem:[%s477 + $0x30] sm:$0xf]
        %v491 = vld [vmem:[%s477 + $0x34] sm:$0xf]
        %v492 = vld [vmem:[%s477 + $0x38] sm:$0xf]
        %v493 = vld [vmem:[%s477 + $0x3c] sm:$0xf]
        %v510 = vunpack.c.l.b16 %v478
        %v511 = vunpack.c.l.b16 %v479
        %v512 = vunpack.c.l.b16 %v480
        %v513 = vunpack.c.l.b16 %v481
        %v514 = vunpack.c.l.b16 %v482
        %v515 = vunpack.c.l.b16 %v483
        %v516 = vunpack.c.l.b16 %v484
        %v517 = vunpack.c.l.b16 %v485
        %v518 = vunpack.c.l.b16 %v486
        %v519 = vunpack.c.l.b16 %v487
        %v520 = vunpack.c.l.b16 %v488
        %v521 = vunpack.c.l.b16 %v489
        %v522 = vunpack.c.l.b16 %v490
        %v523 = vunpack.c.l.b16 %v491
        %v524 = vunpack.c.l.b16 %v492
        %v525 = vunpack.c.l.b16 %v493
        %v526 = vpack.c.b16 %v511, %v510
        %v527 = vpack.c.b16 %v513, %v512
        %v528 = vpack.c.b16 %v515, %v514
        %v529 = vpack.c.b16 %v517, %v516
        %v530 = vpack.c.b16 %v519, %v518
        %v531 = vpack.c.b16 %v521, %v520
        %v532 = vpack.c.b16 %v523, %v522
        %v533 = vpack.c.b16 %v525, %v524
        %542 = vmatpush.bf16.msra.mxu0 %v533
        %543 = vmatpush.bf16.msra.mxu0 %v532
        %544 = vmatpush.bf16.msra.mxu0 %v531
        %545 = vmatpush.bf16.msra.mxu0 %v530
        %546 = vmatpush.bf16.msra.mxu0 %v529
        %547 = vmatpush.bf16.msra.mxu0 %v528
        %548 = vmatpush.bf16.msra.mxu0 %v527
        %549 = vmatpush.bf16.msra.mxu0 %v526
        %550 = vmatmul.bf16.gmra.mxu0 %v476
        %v551 = vpop.f32.mrf.mxu0
        %v552 = vadd.f32 0.0, %v551
        %v553 = vpop.f32.mrf.mxu0
        %v554 = vadd.f32 0.0, %v553
        %555 = vdwg.mxu0
        %v556 = vadd.f32 %v470, %v552
        %v557 = vadd.f32 %v472, %v554
        %v558 = vld [vmem:[%s2] sm:$0x1]
        %v560 = vperm.slane %v558, 0
        %v562 = vmul.f32 %v556, %v560
        %v563 = vmul.f32 %v557, %v560
        %v564 = vld [vmem:[%s3] sm:$0x1]
        %v566 = vperm.slane %v564, 0
        %v568 = vadd.f32 %v562, %v566
        %v569 = vadd.f32 %v563, %v566
        %v570 = vmax.f32 %v568, 0.0
        %v571 = vmax.f32 %v569, 0.0
        %572 = vst [vmem:[#allocation2] sm:$0x1] 0.0
        %573 = vst [vmem:[#allocation2 + $0x11] sm:$0x1] 0.0
        %574 = vst [vmem:[#allocation2 + $0x1] sm:$0xff] %v570
        %575 = vst [vmem:[#allocation2 + $0x9] sm:$0xff] %v571
        %v576 = vld [vmem:[#allocation2] sm:$0xff]
        %v577 = vld [vmem:[#allocation2 + $0x8] sm:$0xff]
        %v578 = vpack.c.bf16 %v577, %v576
        %v579 = vld [vmem:[#allocation6] sm:$0xf]
        %v580 = vld [vmem:[#allocation6 + $0x4] sm:$0xf]
        %v581 = vld [vmem:[#allocation6 + $0x8] sm:$0xf]
        %v582 = vld [vmem:[#allocation6 + $0xc] sm:$0xf]
        %v583 = vld [vmem:[#allocation6 + $0x10] sm:$0xf]
        %v584 = vld [vmem:[#allocation6 + $0x14] sm:$0xf]
        %v585 = vld [vmem:[#allocation6 + $0x18] sm:$0xf]
        %v586 = vld [vmem:[#allocation6 + $0x1c] sm:$0xf]
        %v587 = vld [vmem:[#allocation6 + $0x20] sm:$0xf]
        %v588 = vld [vmem:[#allocation6 + $0x24] sm:$0xf]
        %v589 = vld [vmem:[#allocation6 + $0x28] sm:$0xf]
        %v590 = vld [vmem:[#allocation6 + $0x2c] sm:$0xf]
        %v591 = vld [vmem:[#allocation6 + $0x30] sm:$0xf]
        %v592 = vld [vmem:[#allocation6 + $0x34] sm:$0xf]
        %v593 = vld [vmem:[#allocation6 + $0x38] sm:$0xf]
        %v594 = vld [vmem:[#allocation6 + $0x3c] sm:$0xf]
        %v595 = vld [vmem:[#allocation2 + $0x1] sm:$0xff]
        %v596 = vld [vmem:[#allocation2 + $0x9] sm:$0xff]
        %v597 = vpack.c.bf16 %v596, %v595
        %s598 = scalar_lea.vmem [#allocation6], 64
        %v599 = vld [vmem:[%s598] sm:$0xf]
        %v600 = vld [vmem:[%s598 + $0x4] sm:$0xf]
        %v601 = vld [vmem:[%s598 + $0x8] sm:$0xf]
        %v602 = vld [vmem:[%s598 + $0xc] sm:$0xf]
        %v603 = vld [vmem:[%s598 + $0x10] sm:$0xf]
        %v604 = vld [vmem:[%s598 + $0x14] sm:$0xf]
        %v605 = vld [vmem:[%s598 + $0x18] sm:$0xf]
        %v606 = vld [vmem:[%s598 + $0x1c] sm:$0xf]
        %v607 = vld [vmem:[%s598 + $0x20] sm:$0xf]
        %v608 = vld [vmem:[%s598 + $0x24] sm:$0xf]
        %v609 = vld [vmem:[%s598 + $0x28] sm:$0xf]
        %v610 = vld [vmem:[%s598 + $0x2c] sm:$0xf]
        %v611 = vld [vmem:[%s598 + $0x30] sm:$0xf]
        %v612 = vld [vmem:[%s598 + $0x34] sm:$0xf]
        %v613 = vld [vmem:[%s598 + $0x38] sm:$0xf]
        %v614 = vld [vmem:[%s598 + $0x3c] sm:$0xf]
        %v631 = vunpack.c.l.b16 %v599
        %v632 = vunpack.c.l.b16 %v600
        %v633 = vunpack.c.l.b16 %v601
        %v634 = vunpack.c.l.b16 %v602
        %v635 = vunpack.c.l.b16 %v603
        %v636 = vunpack.c.l.b16 %v604
        %v637 = vunpack.c.l.b16 %v605
        %v638 = vunpack.c.l.b16 %v606
        %v639 = vunpack.c.l.b16 %v607
        %v640 = vunpack.c.l.b16 %v608
        %v641 = vunpack.c.l.b16 %v609
        %v642 = vunpack.c.l.b16 %v610
        %v643 = vunpack.c.l.b16 %v611
        %v644 = vunpack.c.l.b16 %v612
        %v645 = vunpack.c.l.b16 %v613
        %v646 = vunpack.c.l.b16 %v614
        %v647 = vpack.c.b16 %v632, %v631
        %v648 = vpack.c.b16 %v634, %v633
        %v649 = vpack.c.b16 %v636, %v635
        %v650 = vpack.c.b16 %v638, %v637
        %v651 = vpack.c.b16 %v640, %v639
        %v652 = vpack.c.b16 %v642, %v641
        %v653 = vpack.c.b16 %v644, %v643
        %v654 = vpack.c.b16 %v646, %v645
        %663 = vmatpush.bf16.msra.mxu0 %v654
        %664 = vmatpush.bf16.msra.mxu0 %v653
        %665 = vmatpush.bf16.msra.mxu0 %v652
        %666 = vmatpush.bf16.msra.mxu0 %v651
        %667 = vmatpush.bf16.msra.mxu0 %v650
        %668 = vmatpush.bf16.msra.mxu0 %v649
        %669 = vmatpush.bf16.msra.mxu0 %v648
        %670 = vmatpush.bf16.msra.mxu0 %v647
        %671 = vmatmul.bf16.gmra.mxu0 %v597
        %v672 = vpop.f32.mrf.mxu0
        %v673 = vadd.f32 0.0, %v672
        %v674 = vpop.f32.mrf.mxu0
        %v675 = vadd.f32 0.0, %v674
        %676 = vdwg.mxu0
        %v693 = vunpack.c.l.b16 %v579
        %v694 = vunpack.c.l.b16 %v580
        %v695 = vunpack.c.l.b16 %v581
        %v696 = vunpack.c.l.b16 %v582
        %v697 = vunpack.c.l.b16 %v583
        %v698 = vunpack.c.l.b16 %v584
        %v699 = vunpack.c.l.b16 %v585
        %v700 = vunpack.c.l.b16 %v586
        %v701 = vunpack.c.l.b16 %v587
        %v702 = vunpack.c.l.b16 %v588
        %v703 = vunpack.c.l.b16 %v589
        %v704 = vunpack.c.l.b16 %v590
        %v705 = vunpack.c.l.b16 %v591
        %v706 = vunpack.c.l.b16 %v592
        %v707 = vunpack.c.l.b16 %v593
        %v708 = vunpack.c.l.b16 %v594
        %v709 = vpack.c.b16 %v694, %v693
        %v710 = vpack.c.b16 %v696, %v695
        %v711 = vpack.c.b16 %v698, %v697
        %v712 = vpack.c.b16 %v700, %v699
        %v713 = vpack.c.b16 %v702, %v701
        %v714 = vpack.c.b16 %v704, %v703
        %v715 = vpack.c.b16 %v706, %v705
        %v716 = vpack.c.b16 %v708, %v707
        %725 = vmatpush.bf16.msra.mxu0 %v716
        %726 = vmatpush.bf16.msra.mxu0 %v715
        %727 = vmatpush.bf16.msra.mxu0 %v714
        %728 = vmatpush.bf16.msra.mxu0 %v713
        %729 = vmatpush.bf16.msra.mxu0 %v712
        %730 = vmatpush.bf16.msra.mxu0 %v711
        %731 = vmatpush.bf16.msra.mxu0 %v710
        %732 = vmatpush.bf16.msra.mxu0 %v709
        %733 = vmatmul.bf16.gmra.mxu0 %v578
        %v734 = vpop.f32.mrf.mxu0
        %v735 = vadd.f32 %v673, %v734
        %v736 = vpop.f32.mrf.mxu0
        %v737 = vadd.f32 %v675, %v736
        %738 = vdwg.mxu0
        %v739 = vld [vmem:[#allocation2 + $0x2] sm:$0xff]
        %v740 = vld [vmem:[#allocation2 + $0xa] sm:$0xff]
        %v741 = vpack.c.bf16 %v740, %v739
        %s742 = scalar_lea.vmem [#allocation6], 128
        %v743 = vld [vmem:[%s742] sm:$0xf]
        %v744 = vld [vmem:[%s742 + $0x4] sm:$0xf]
        %v745 = vld [vmem:[%s742 + $0x8] sm:$0xf]
        %v746 = vld [vmem:[%s742 + $0xc] sm:$0xf]
        %v747 = vld [vmem:[%s742 + $0x10] sm:$0xf]
        %v748 = vld [vmem:[%s742 + $0x14] sm:$0xf]
        %v749 = vld [vmem:[%s742 + $0x18] sm:$0xf]
        %v750 = vld [vmem:[%s742 + $0x1c] sm:$0xf]
        %v751 = vld [vmem:[%s742 + $0x20] sm:$0xf]
        %v752 = vld [vmem:[%s742 + $0x24] sm:$0xf]
        %v753 = vld [vmem:[%s742 + $0x28] sm:$0xf]
        %v754 = vld [vmem:[%s742 + $0x2c] sm:$0xf]
        %v755 = vld [vmem:[%s742 + $0x30] sm:$0xf]
        %v756 = vld [vmem:[%s742 + $0x34] sm:$0xf]
        %v757 = vld [vmem:[%s742 + $0x38] sm:$0xf]
        %v758 = vld [vmem:[%s742 + $0x3c] sm:$0xf]
        %v775 = vunpack.c.l.b16 %v743
        %v776 = vunpack.c.l.b16 %v744
        %v777 = vunpack.c.l.b16 %v745
        %v778 = vunpack.c.l.b16 %v746
        %v779 = vunpack.c.l.b16 %v747
        %v780 = vunpack.c.l.b16 %v748
        %v781 = vunpack.c.l.b16 %v749
        %v782 = vunpack.c.l.b16 %v750
        %v783 = vunpack.c.l.b16 %v751
        %v784 = vunpack.c.l.b16 %v752
        %v785 = vunpack.c.l.b16 %v753
        %v786 = vunpack.c.l.b16 %v754
        %v787 = vunpack.c.l.b16 %v755
        %v788 = vunpack.c.l.b16 %v756
        %v789 = vunpack.c.l.b16 %v757
        %v790 = vunpack.c.l.b16 %v758
        %v791 = vpack.c.b16 %v776, %v775
        %v792 = vpack.c.b16 %v778, %v777
        %v793 = vpack.c.b16 %v780, %v779
        %v794 = vpack.c.b16 %v782, %v781
        %v795 = vpack.c.b16 %v784, %v783
        %v796 = vpack.c.b16 %v786, %v785
        %v797 = vpack.c.b16 %v788, %v787
        %v798 = vpack.c.b16 %v790, %v789
        %807 = vmatpush.bf16.msra.mxu0 %v798
        %808 = vmatpush.bf16.msra.mxu0 %v797
        %809 = vmatpush.bf16.msra.mxu0 %v796
        %810 = vmatpush.bf16.msra.mxu0 %v795
        %811 = vmatpush.bf16.msra.mxu0 %v794
        %812 = vmatpush.bf16.msra.mxu0 %v793
        %813 = vmatpush.bf16.msra.mxu0 %v792
        %814 = vmatpush.bf16.msra.mxu0 %v791
        %815 = vmatmul.bf16.gmra.mxu0 %v741
        %v816 = vpop.f32.mrf.mxu0
        %v817 = vadd.f32 0.0, %v816
        %v818 = vpop.f32.mrf.mxu0
        %v819 = vadd.f32 0.0, %v818
        %820 = vdwg.mxu0
        %v821 = vadd.f32 %v735, %v817
        %v822 = vadd.f32 %v737, %v819
        %v823 = vld [vmem:[%s310 + $0x1] sm:$0xff]
        %v824 = vld [vmem:[%s310 + $0x9] sm:$0xff]
        %v825 = vld [vmem:[%s5] sm:$0x1]
        %v827 = vperm.slane %v825, 0
        %v829 = vmul.f32 %v821, %v827
        %v830 = vmul.f32 %v822, %v827
        %v831 = vld [vmem:[%s6] sm:$0x1]
        %v833 = vperm.slane %v831, 0
        %v835 = vadd.f32 %v829, %v833
        %v836 = vadd.f32 %v830, %v833
        %v837 = vadd.f32 %v835, %v823
        %v838 = vadd.f32 %v836, %v824
        %v839 = vmax.f32 %v837, 0.0
        %v840 = vmax.f32 %v838, 0.0
        %841 = vst [vmem:[%s305] sm:$0xff] %v839
        %842 = vst [vmem:[%s305 + $0x8] sm:$0xff] %v840
        %s843 = sand.u32 %s183, 1
        %s844 = scalar_lea.sflag [#allocation5], %s843
        %s845 = sand.u32 %s183, 1
        %s846 = smul.addr %s845, 16
        %s847 = scalar_lea.vmem [#allocation8], %s846
        // Predicated region
        $region57: #{tpu_custom_call.1} parent=47 // pred_check
          %p848 = pneg %p193
        $region58: #{tpu_custom_call.1} parent=47 // pred_check_branch
          %850 = sbr.rel (%p848) target = $region60
        $region59: #{tpu_custom_call.1} parent=47 // pred_region
          %852 = vsyncadd %s844, 0
          %s853 = smul.addr %s23, 2
          %s854 = smul.addr %s853, 8
          %s855 = scalar_lea.hbm %s7, %s854
          %s856 = sshll.u32 %s847, 4
          %s857 = int_to_ptr.vmem [resolvable:$true] %s856
          %s858 = sshll.u32 %s855, 4
          %s859 = int_to_ptr.hbm [resolvable:$true] %s858
          %864 = dma.vmem_to_hbm [thread:$0]  %s857, 256, %s859, %s844, 128, 128, 8
        $region60: #{tpu_custom_call.1} parent=47 // pred_fallthru
          _
      $region48: #{tpu_custom_call.1} parent=5 // pred_fallthru
        _
      %p865 = scmp.le.s32.totalorder 2, %s18
      // Predicated region
      $region61: #{tpu_custom_call.1} parent=5 // pred_check
        %p866 = pneg %p865
      $region62: #{tpu_custom_call.1} parent=5 // pred_check_branch
        %868 = sbr.rel (%p866) target = $region64
      $region63: #{tpu_custom_call.1} parent=5 // pred_region
        %s869 = ssub.s32 %s18, 2
        // Predicated region
        $region65: #{tpu_custom_call.1} parent=63 // pred_check
          %p870 = pneg %p199
        $region66: #{tpu_custom_call.1} parent=63 // pred_check_branch
          %872 = sbr.rel (%p870) target = $region68
        $region67: #{tpu_custom_call.1} parent=63 // pred_region
          %s873 = sand.u32 %s184, 1
          %s874 = scalar_lea.sflag [#allocation5], %s873
          %s875 = sand.u32 %s184, 1
          %s876 = smul.addr %s875, 16
          %s877 = scalar_lea.vmem [#allocation8], %s876
          %879 = dma.done %s874, 256
        $region68: #{tpu_custom_call.1} parent=63 // pred_fallthru
          _
      $region64: #{tpu_custom_call.1} parent=5 // pred_fallthru
        _
    $region6: #{tpu_custom_call.1} parent=1 // loop_footer
      %s22 = sadd.s32 1, %s18
    $region7: #{tpu_custom_call.1} parent=1 // loop_footer_branch
      %17 = sbr.rel target = $region3
    $region8: #{tpu_custom_call.1} parent=1 // loop_exit
      _
    %880 = vsyncpa [#allocation4], 1
    %s881 = scalar_lea.sflag [#allocation4], 1
    %882 = vsyncpa %s881, 1
    %883 = vsyncpa [#allocation7], 1
    %884 = vsyncpa [#allocation5], 1
    %s885 = scalar_lea.sflag [#allocation5], 1
    %886 = vsyncpa %s885, 1

</llo_original>
